<compile_context>
chip_gen: v7x
topology: tpu7x:2x2x1
jax: 0.10.0
libtpu: 0.0.40
codegen_flags: <defaults>
</compile_context>

<pallas_src>
import math

import jax
import jax.numpy as jnp
from jax.experimental import pallas as pl
from jax.experimental.pallas import tpu as pltpu


def _round_up(x, m):
    return ((x + m - 1) // m) * m


_DEVICE_DEFAULTS = None


def _device_defaults():
    """Per-TPU-generation tiling defaults (review: tm near the compute ridge)."""
    global _DEVICE_DEFAULTS
    if _DEVICE_DEFAULTS is None:
        kind = ""
        try:
            kind = jax.devices()[0].device_kind.lower()
        except Exception:
            kind = ""
        if "v7" in kind:
            # 64 MiB physical VMEM per TC -> cap at 56 MiB, 2 TCs.
            cfg = dict(tm=512, tn=256, vmem=56 * 1024 * 1024, wbuf=3,
                       cores=2, bf16_act=True)
        elif "v6" in kind:
            cfg = dict(tm=768, tn=512, vmem=104 * 1024 * 1024, wbuf=3,
                       cores=1, bf16_act=True)
        elif "v5p" in kind or "v4" in kind:
            cfg = dict(tm=512, tn=512, vmem=96 * 1024 * 1024, wbuf=2,
                       cores=2, bf16_act=False)
        elif "v5e" in kind or "v5 lite" in kind:
            cfg = dict(tm=256, tn=256, vmem=96 * 1024 * 1024, wbuf=2,
                       cores=1, bf16_act=False)
        else:  # unknown: conservative
            cfg = dict(tm=256, tn=256, vmem=64 * 1024 * 1024, wbuf=2,
                       cores=1, bf16_act=False)
        _DEVICE_DEFAULTS = cfg
    return _DEVICE_DEFAULTS


def _make_llama_mlp_kernel(act_dtype):
    """act_dtype: None (keep fp32 SiLU) or jnp.bfloat16 (bf16 VPU/EUP chips)."""

    def kernel(x_ref, wgu_ref, wd_ref, o_ref, acc_ref):
        # grid = (num_token_tiles, num_intermediate_tiles)
        n = pl.program_id(1)

        @pl.when(n == 0)
        def _():
            acc_ref[...] = jnp.zeros_like(acc_ref)

        tn = wd_ref.shape[0]                  # intermediate tile width (static)
        x = x_ref[...]

        # One fused MXU pass: [tm, H] @ [H, 2*tn] -> gate | up side by side.
        # wgu_ref block is (1, H, 2*tn); index the leading size-1 dim away.
        gu = jnp.dot(x, wgu_ref[0], preferred_element_type=jnp.float32)
        g = gu[:, :tn]                        # tn is a multiple of 128 -> lane-aligned split
        u = gu[:, tn:]

        if act_dtype is not None:
            g = g.astype(act_dtype)
            u = u.astype(act_dtype)

        # SiLU(g) * u on the VPU/EUP.
        h = (g * jax.nn.sigmoid(g)) * u

        # Down-projection partial product, accumulated in fp32.
        acc_ref[...] += jnp.dot(h.astype(wd_ref.dtype), wd_ref[...],
                                preferred_element_type=jnp.float32)

        @pl.when(n == pl.num_programs(1) - 1)
        def _():
            o_ref[...] = acc_ref[...].astype(o_ref.dtype)

    return kernel


def _maybe_buffered_spec(block_shape, index_map, buffers):
    """BlockSpec with N-deep weight buffering when requested/available."""
    if buffers and buffers > 2 and hasattr(pl, "Buffered"):
        try:
            return pl.BlockSpec(block_shape, index_map,
                                pipeline_mode=pl.Buffered(buffers))
        except TypeError:
            pass  # older Pallas without pipeline_mode: fall back to default
    return pl.BlockSpec(block_shape, index_map)


def prepare_llama_mlp_params(gate_w, up_w, down_w, *, tn=None, dtype=None):
    """One-time weight preparation (NOT in the per-call hot path).

    gate_w, up_w: [intermediate, hidden]; down_w: [hidden, intermediate]
    (PyTorch nn.Linear layout).  Transposes to matmul-friendly layout, pads
    the intermediate dim to a multiple of the (lane-aligned) tile, and fuses
    gate/up CONTIGUOUSLY per tile: wgu[nt, H, 2*tn] so each weight block DMA
    is one contiguous slab.  For real model sizes pass dtype=jnp.bfloat16.
    """
    inter, hidden = gate_w.shape
    assert up_w.shape == (inter, hidden)
    assert down_w.shape == (hidden, inter)

    if tn is None:
        tn = _device_defaults()["tn"]

    if dtype is not None:
        gate_w = gate_w.astype(dtype)
        up_w = up_w.astype(dtype)
        down_w = down_w.astype(dtype)

    # Lane-aligned intermediate tile (always a multiple of 128, even for tiny
    # models, so the gate/up split of the MXU result needs no relayout).
    tn = max(128, (tn // 128) * 128)
    tn = min(tn, _round_up(inter, 128))
    inter_p = _round_up(inter, tn)
    pad = inter_p - inter

    wg = gate_w.T          # [H, I]
    wu = up_w.T            # [H, I]
    wd = down_w.T          # [I, H]
    if pad:
        # Zero gate/up columns => h == 0 => padded columns contribute nothing.
        wg = jnp.pad(wg, ((0, 0), (0, pad)))
        wu = jnp.pad(wu, ((0, 0), (0, pad)))
        wd = jnp.pad(wd, ((0, pad), (0, 0)))

    nt = inter_p // tn
    # Per tile n: columns [Wg tile n | Wu tile n], contiguous as wgu[n] = [H, 2*tn].
    wg3 = wg.reshape(hidden, nt, tn).transpose(1, 0, 2)   # [nt, H, tn]
    wu3 = wu.reshape(hidden, nt, tn).transpose(1, 0, 2)   # [nt, H, tn]
    wgu = jnp.concatenate([wg3, wu3], axis=-1)            # [nt, H, 2*tn]

    return {"wgu": wgu, "wd": wd, "tn": tn, "hidden": hidden, "inter": inter}


def llama_mlp(x, params, *, tm=None, vmem_limit_bytes=None,
              weight_buffers=None, split_small_m=None):
    """x: [..., hidden]; params from prepare_llama_mlp_params.

    Defaults (tm / vmem cap / weight buffering / small-M split) are chosen per
    TPU generation; override explicitly for tuning sweeps.
    """
    d = _device_defaults()
    if tm is None:
        tm = d["tm"]
    if vmem_limit_bytes is None:
        vmem_limit_bytes = d["vmem"]
    if weight_buffers is None:
        weight_buffers = d["wbuf"]
    if split_small_m is None:
        split_small_m = d["cores"] >= 2

    wgu, wd, tn = params["wgu"], params["wd"], params["tn"]
    hidden = params["hidden"]
    nt = wgu.shape[0]
    inter_p = wd.shape[0]
    assert inter_p == nt * tn

    orig_shape = x.shape
    assert orig_shape[-1] == hidden
    M = math.prod(orig_shape[:-1])
    x2 = x.reshape(M, hidden)

    # Bounded, sublane-aligned token tile; pad the token dim to a multiple.
    m_rounded = _round_up(M, 8)
    tm = _round_up(min(tm, m_rounded), 8)
    if split_small_m and tm >= m_rounded and m_rounded >= 16:
        # Small-M / decode on a 2-TensorCore chip: ensure >=2 token tiles so
        # the "parallel" axis can be sharded across both cores.
        tm = _round_up((m_rounded + 1) // 2, 8)
    M_p = _round_up(M, tm)
    if M_p != M:
        x2 = jnp.pad(x2, ((0, M_p - M), (0, 0)))

    grid = (M_p // tm, nt)

    # SiLU in bf16 only on chips with a bf16 VPU/EUP and bf16 operands.
    act_dtype = jnp.bfloat16 if (d["bf16_act"] and x.dtype == jnp.bfloat16) else None
    kernel = _make_llama_mlp_kernel(act_dtype)

    # Deeper weight buffering only makes sense with enough intermediate tiles.
    wbuf = weight_buffers if (weight_buffers and nt >= weight_buffers) else 0

    out = pl.pallas_call(
        kernel,
        out_shape=jax.ShapeDtypeStruct((M_p, hidden), x.dtype),
        grid_spec=pltpu.PrefetchScalarGridSpec(
            num_scalar_prefetch=0,
            grid=grid,
            in_specs=[
                # x tile: resident across the intermediate axis.
                pl.BlockSpec((tm, hidden), lambda m, n: (m, 0)),
                # Fused [Wg|Wu] tile: one contiguous (H, 2*tn) slab per step.
                _maybe_buffered_spec((1, hidden, 2 * tn),
                                     lambda m, n: (n, 0, 0), wbuf),
                # Wd tile: contiguous (tn, H) slab per step.
                _maybe_buffered_spec((tn, hidden), lambda m, n: (n, 0), wbuf),
            ],
            out_specs=pl.BlockSpec((tm, hidden), lambda m, n: (m, 0)),
            scratch_shapes=[pltpu.VMEM((tm, hidden), jnp.float32)],
        ),
        compiler_params=pltpu.CompilerParams(
            dimension_semantics=("parallel", "arbitrary"),
            vmem_limit_bytes=vmem_limit_bytes,
        ),
    )(x2, wgu, wd)

    if M_p != M:
        out = out[:M]
    return out.reshape(orig_shape)


def llama_mlp_ref(x, gate_w, up_w, down_w):
    g = x @ gate_w.T
    u = x @ up_w.T
    h = (g * jax.nn.sigmoid(g)) * u
    return h @ down_w.T


if __name__ == "__main__":
    key = jax.random.PRNGKey(0)
    keys = jax.random.split(key, 12)
    (kx, kg, ku, kd, kx2, kg2, ku2, kd2, kx3, kg3, ku3, kd3) = keys

    # ---- Test 1: divisible shapes, multi-tile grid on both axes (fp32) ----
    batch, seq, hidden, inter = 2, 8, 128, 256
    x = jax.random.normal(kx, (batch, seq, hidden), dtype=jnp.float32)
    # PyTorch nn.Linear weight layout: [out_features, in_features]
    gate_w = jax.random.normal(kg, (inter, hidden), dtype=jnp.float32) * 0.02
    up_w = jax.random.normal(ku, (inter, hidden), dtype=jnp.float32) * 0.02
    down_w = jax.random.normal(kd, (hidden, inter), dtype=jnp.float32) * 0.02

    params = prepare_llama_mlp_params(gate_w, up_w, down_w, tn=128)   # 2 inter tiles
    y = jax.block_until_ready(llama_mlp(x, params, tm=8))             # 2 token tiles
    y_ref = llama_mlp_ref(x, gate_w, up_w, down_w)
    assert y.shape == x.shape
    assert jnp.allclose(y, y_ref, atol=1e-5, rtol=1e-5), "fp32 mismatch vs reference"

    # ---- Test 2: non-divisible token count + padded intermediate dim ----
    b2, s2, h2, i2 = 3, 5, 64, 192            # M=15 -> pads to 16; I=192 -> pads to 256
    x_b = jax.random.normal(kx2, (b2, s2, h2), dtype=jnp.float32)
    gw2 = jax.random.normal(kg2, (i2, h2), dtype=jnp.float32) * 0.05
    uw2 = jax.random.normal(ku2, (i2, h2), dtype=jnp.float32) * 0.05
    dw2 = jax.random.normal(kd2, (h2, i2), dtype=jnp.float32) * 0.05
    p2 = prepare_llama_mlp_params(gw2, uw2, dw2, tn=128)
    y2 = jax.block_until_ready(llama_mlp(x_b, p2, tm=8))
    y2_ref = llama_mlp_ref(x_b, gw2, uw2, dw2)
    assert y2.shape == x_b.shape
    assert jnp.allclose(y2, y2_ref, atol=1e-5, rtol=1e-5), "padded-shape mismatch"

    # ---- Test 3: bf16 operands with fp32 accumulation ----
    params_bf = prepare_llama_mlp_params(gate_w, up_w, down_w, tn=128,
                                         dtype=jnp.bfloat16)
    y_bf = jax.block_until_ready(llama_mlp(x.astype(jnp.bfloat16), params_bf, tm=8))
    assert y_bf.dtype == jnp.bfloat16
    assert jnp.allclose(y_bf.astype(jnp.float32), y_ref, atol=5e-3, rtol=5e-2), \
        "bf16 mismatch vs reference"

    # ---- Test 4: deep intermediate grid + weight triple-buffering + small-M
    #      token-tile split (the v7x megacore path), bf16 weights/activations ----
    b3, s3, h3, i3 = 4, 8, 256, 512           # M=32, 4 intermediate tiles of 128
    x3 = jax.random.normal(kx3, (b3, s3, h3), dtype=jnp.float32)
    gw3 = jax.random.normal(kg3, (i3, h3), dtype=jnp.float32) * 0.02
    uw3 = jax.random.normal(ku3, (i3, h3), dtype=jnp.float32) * 0.02
    dw3 = jax.random.normal(kd3, (h3, i3), dtype=jnp.float32) * 0.02
    p3 = prepare_llama_mlp_params(gw3, uw3, dw3, tn=128, dtype=jnp.bfloat16)
    y3 = jax.block_until_ready(
        llama_mlp(x3.astype(jnp.bfloat16), p3, tm=64,
                  weight_buffers=3, split_small_m=True))
    y3_ref = llama_mlp_ref(
        x3.astype(jnp.bfloat16).astype(jnp.float32),
        gw3.astype(jnp.bfloat16).astype(jnp.float32),
        uw3.astype(jnp.bfloat16).astype(jnp.float32),
        dw3.astype(jnp.bfloat16).astype(jnp.float32))
    assert y3.shape == x3.shape
    assert jnp.allclose(y3.astype(jnp.float32), y3_ref, atol=2e-2, rtol=1e-1), \
        "buffered/split-path bf16 mismatch vs reference"

    print("KERNEL_OK")
</pallas_src>

<mosaic_0001>
module attributes {stable_mosaic.version = 11 : i64} {
  func.func @kernel(%arg0: i32, %arg1: i32, %arg2: memref<8x128xf32, #tpu.memory_space<vmem>>, %arg3: memref<1x128x256xf32, #tpu.memory_space<vmem>>, %arg4: memref<128x128xf32, #tpu.memory_space<vmem>>, %arg5: memref<8x128xf32, #tpu.memory_space<vmem>>, %arg6: memref<8x128xf32, #tpu.memory_space<vmem>>) attributes {dimension_semantics = [#tpu.dimension_semantics<parallel>, #tpu.dimension_semantics<arbitrary>], iteration_bounds = array<i64: 2, 2>, scalar_prefetch = 0 : i64, scratch_operands = 1 : i64, tpu.core_type = #tpu.core_type<tc>, window_params = [{transform_indices = @transform_0, window_bounds = array<i64: 8, 128>}, {transform_indices = @transform_1, window_bounds = array<i64: 1, 128, 256>}, {transform_indices = @transform_2, window_bounds = array<i64: 128, 128>}, {transform_indices = @transform_3, window_bounds = array<i64: 8, 128>}]} {
    %c0_i32 = arith.constant 0 : i32
    %0 = arith.cmpi eq, %arg1, %c0_i32 : i32
    %1 = arith.extui %0 : i1 to i32
    %c0_i32_0 = arith.constant 0 : i32
    %2 = arith.cmpi ne, %1, %c0_i32_0 : i32
    scf.if %2 {
      %cst_14 = arith.constant 0.000000e+00 : f32
      %24 = vector.broadcast %cst_14 : f32 to vector<8x128xf32>
      %c0_15 = arith.constant 0 : index
      %c0_16 = arith.constant 0 : index
      %25 = vector.load %arg6[%c0_15, %c0_16] : memref<8x128xf32, #tpu.memory_space<vmem>>, vector<8x128xf32>
      tpu.vector_store %arg6[%c0_15, %c0_16], %24 {strides = array<i32>} : memref<8x128xf32, #tpu.memory_space<vmem>>, vector<8x128xf32>,
    } else {
    }
    %c0 = arith.constant 0 : index
    %c0_1 = arith.constant 0 : index
    %3 = vector.load %arg2[%c0, %c0_1] : memref<8x128xf32, #tpu.memory_space<vmem>>, vector<8x128xf32>
    %c0_2 = arith.constant 0 : index
    %c0_3 = arith.constant 0 : index
    %c0_4 = arith.constant 0 : index
    %4 = vector.load %arg3[%c0_2, %c0_3, %c0_4] : memref<1x128x256xf32, #tpu.memory_space<vmem>>, vector<1x128x256xf32>
    %5 = vector.shape_cast %4 : vector<1x128x256xf32> to vector<128x256xf32>
    %cst = arith.constant dense<0.000000e+00> : vector<8x256xf32>
    %6 = tpu.matmul %3, %5, %cst {dimension_numbers = #tpu.dot_dimension_numbers<[1], [0], [0], [1], [0, 0, 1, 1], [], []>} : vector<8x128xf32>, vector<128x256xf32>, vector<8x256xf32> -> vector<8x256xf32>
    %7 = vector.extract_strided_slice %6 {offsets = [0, 0], sizes = [8, 128], strides = [1, 1]} : vector<8x256xf32> to vector<8x128xf32>
    %8 = vector.extract_strided_slice %6 {offsets = [0, 128], sizes = [8, 128], strides = [1, 1]} : vector<8x256xf32> to vector<8x128xf32>
    %9 = arith.negf %7 : vector<8x128xf32>
    %10 = math.exp %9 : vector<8x128xf32>
    %cst_5 = arith.constant 1.000000e+00 : f32
    %11 = vector.broadcast %cst_5 : f32 to vector<8x128xf32>
    %12 = arith.addf %11, %10 : vector<8x128xf32>
    %13 = arith.divf %11, %12 : vector<8x128xf32>
    %14 = arith.mulf %7, %13 : vector<8x128xf32>
    %15 = arith.mulf %14, %8 : vector<8x128xf32>
    %c0_6 = arith.constant 0 : index
    %c0_7 = arith.constant 0 : index
    %16 = vector.load %arg6[%c0_6, %c0_7] : memref<8x128xf32, #tpu.memory_space<vmem>>, vector<8x128xf32>
    %c0_8 = arith.constant 0 : index
    %c0_9 = arith.constant 0 : index
    %17 = vector.load %arg4[%c0_8, %c0_9] : memref<128x128xf32, #tpu.memory_space<vmem>>, vector<128x128xf32>
    %cst_10 = arith.constant dense<0.000000e+00> : vector<8x128xf32>
    %18 = tpu.matmul %15, %17, %cst_10 {dimension_numbers = #tpu.dot_dimension_numbers<[1], [0], [0], [1], [0, 0, 1, 1], [], []>} : vector<8x128xf32>, vector<128x128xf32>, vector<8x128xf32> -> vector<8x128xf32>
    %19 = arith.addf %16, %18 : vector<8x128xf32>
    %c0_11 = arith.constant 0 : index
    %c0_12 = arith.constant 0 : index
    %20 = vector.load %arg6[%c0_11, %c0_12] : memref<8x128xf32, #tpu.memory_space<vmem>>, vector<8x128xf32>
    tpu.vector_store %arg6[%c0_11, %c0_12], %19 {strides = array<i32>} : memref<8x128xf32, #tpu.memory_space<vmem>>, vector<8x128xf32>,
    %c1_i32 = arith.constant 1 : i32
    %21 = arith.cmpi eq, %arg1, %c1_i32 : i32
    %22 = arith.extui %21 : i1 to i32
    %c0_i32_13 = arith.constant 0 : i32
    %23 = arith.cmpi ne, %22, %c0_i32_13 : i32
    scf.if %23 {
      %c0_14 = arith.constant 0 : index
      %c0_15 = arith.constant 0 : index
      %24 = vector.load %arg6[%c0_14, %c0_15] : memref<8x128xf32, #tpu.memory_space<vmem>>, vector<8x128xf32>
      %c0_16 = arith.constant 0 : index
      %c0_17 = arith.constant 0 : index
      %25 = vector.load %arg5[%c0_16, %c0_17] : memref<8x128xf32, #tpu.memory_space<vmem>>, vector<8x128xf32>
      tpu.vector_store %arg5[%c0_16, %c0_17], %24 {strides = array<i32>} : memref<8x128xf32, #tpu.memory_space<vmem>>, vector<8x128xf32>,
    } else {
    }
    return
  }
  func.func @transform_0(%arg0: i32, %arg1: i32) -> (i32, i32) {
    %c0_i32 = arith.constant 0 : i32
    %c0_i32_0 = arith.constant 0 : i32
    return %arg0, %c0_i32 : i32, i32
  }
  func.func @transform_1(%arg0: i32, %arg1: i32) -> (i32, i32, i32) {
    %c0_i32 = arith.constant 0 : i32
    %c0_i32_0 = arith.constant 0 : i32
    %c0_i32_1 = arith.constant 0 : i32
    return %arg1, %c0_i32, %c0_i32_0 : i32, i32, i32
  }
  func.func @transform_2(%arg0: i32, %arg1: i32) -> (i32, i32) {
    %c0_i32 = arith.constant 0 : i32
    %c0_i32_0 = arith.constant 0 : i32
    return %arg1, %c0_i32 : i32, i32
  }
  func.func @transform_3(%arg0: i32, %arg1: i32) -> (i32, i32) {
    %c0_i32 = arith.constant 0 : i32
    %c0_i32_0 = arith.constant 0 : i32
    return %arg0, %c0_i32 : i32, i32
  }
}

</mosaic_0001>

<llo_original>
// kernel: tpu_custom_call.1
$region0: #{tpu_custom_call.1}
  #allocation0 [shape = 'u32[]', space=smem, size = 0x4, offset = 0x4, fixed_abs, tag = 'smem constant byte address 0x4 - core index']
  #allocation1 [shape = 'u32[144,128]{1,0:T(1,128)}', space=vmem, size = 0x12000, scoped, tag = 'internal scratch']
  #allocation2 [shape = 'f32[8,128]{1,0:T(8,128)}', space=vmem, size = 0x1000, scoped, tag = 'scratch operand']
  %s0 = inlined_call_operand.hbm [shape: f32[16,128], index: 0, kind: input, shape index: {}]
  %s1 = inlined_call_operand.hbm [shape: f32[2,128,256], index: 1, kind: input, shape index: {}]
  %s2 = inlined_call_operand.hbm [shape: f32[256,128], index: 2, kind: input, shape index: {}]
  %s3 = inlined_call_operand.hbm [shape: f32[16,128], index: 3, kind: output, shape index: {}]
  %s4 = sld [smem:[#allocation0]]
  $region65: #{tpu_custom_call.1} parent=0
    _
  %s6 = ssub.s32 1, %s4
  %s7 = scalar_select 0, %s6, %s4
  $region1: #{tpu_custom_call.1} parent=0
    #allocation3 [shape = 'u8[8192]{0}', space=vmem, size = 0x2000, scoped, tag = 'input window, operand 0']
    #allocation4 [shape = 's32[2]{0}', space=sflag, size = 0x8, scoped, tag = 'scoped memory for tpu_custom_call.1']
    #allocation5 [shape = 's32[2]{0}', space=sflag, size = 0x8, scoped, tag = 'scoped memory for tpu_custom_call.1']
    #allocation6 [shape = 'u8[262144]{0}', space=vmem, size = 0x40000, scoped, tag = 'input window, operand 1']
    #allocation7 [shape = 's32[2]{0}', space=sflag, size = 0x8, scoped, tag = 'scoped memory for tpu_custom_call.1']
    #allocation8 [shape = 'u8[131072]{0}', space=vmem, size = 0x20000, scoped, tag = 'input window, operand 2']
    #allocation9 [shape = 'u8[8192]{0}', space=vmem, size = 0x2000, scoped, tag = 'output window, operand 0']
    %8 = vsyncpa [#allocation4], 0
    %s9 = scalar_lea.sflag [#allocation4], 1
    %10 = vsyncpa %s9, 0
    %11 = vsyncpa [#allocation7], 0
    %s12 = scalar_lea.sflag [#allocation7], 1
    %13 = vsyncpa %s12, 0
    %14 = vsyncpa [#allocation5], 0
    %s15 = scalar_lea.sflag [#allocation5], 1
    %16 = vsyncpa %s15, 0
    loop: start=0, step=1, limit=6
    $region2: #{tpu_custom_call.1} parent=1 // loop_pre_header
      _
    $region3: #{tpu_custom_call.1} parent=1 // loop_header
      %s18 = sphi 0, %s22
      %p19 = scmp.ge.s32.totalorder %s18, 6
      %s25 = sphi 0, %s37
      %s26 = sphi 0, %s33
      %s27 = sphi 0, %s25
      %s28 = sphi 0, %s26
      %s29 = sphi 0, %s27
      %s30 = sphi 0, %s28
      %s40 = sphi 0, %s42
      %s43 = sphi 0, %s40
      %s44 = sphi 0, %s43
      %s60 = sphi 0, %s44
      %s66 = sphi 0, %s68
      %s69 = sphi 0, %s66
      %s70 = sphi 0, %s69
      %s86 = sphi 0, %s70
      %s92 = sphi 0, %s94
      %s95 = sphi 0, %s92
      %s96 = sphi 0, %s95
      %s112 = sphi 0, %s96
      %s118 = sphi 0, %s120
      %s121 = sphi 0, %s118
      %s122 = sphi 0, %s121
      %s138 = sphi 0, %s122
    $region4: #{tpu_custom_call.1} parent=1 // loop_header_branch
      %21 = sbr.rel (%p19) target = $region8
    $region5: #{tpu_custom_call.1} parent=1 // loop_body
      %s23 = ssub.s32 %s18, 1
      %s24 = ssub.s32 %s18, 2
      %s31 = sadd.s32 1, %s26
      %p32 = scmp.ge.s32.totalorder %s31, 2
      %s33 = scalar_select %p32, 0, %s31
      %s34 = sadd.s32 1, %s25
      %s35 = scalar_select %p32, %s34, %s25
      %p36 = scmp.ge.s32.totalorder %s35, 2
      %s37 = scalar_select %p36, 0, %s35
      %s38 = ssub.s32 %s25, %s37
      %p39 = scmp.eq.s32.totalorder %s38, 0
      %s41 = sadd.s32 %s40, 1
      %s42 = scalar_select %p39, %s40, %s41
      %p45 = pneg %p39
      %p46 = scmp.eq.s32.totalorder %s18, 3
      %p47 = por %p45, %p46
      %p48 = scmp.ne.s32.totalorder %s40, %s43
      %p49 = scmp.eq.s32.totalorder %s18, 0
      %p50 = por %p48, %p49
      %p51 = scmp.ne.s32.totalorder %s40, %s43
      %p52 = scmp.eq.s32.totalorder %s23, 3
      %p53 = por %p51, %p52
      %p54 = scmp.ne.s32.totalorder %s43, %s44
      %p55 = scmp.eq.s32.totalorder %s23, 0
      %p56 = por %p54, %p55
      %p57 = scmp.ne.s32.totalorder %s43, %s44
      %p58 = scmp.eq.s32.totalorder %s24, 3
      %p59 = por %p57, %p58
      %p61 = scmp.ne.s32.totalorder %s44, %s60
      %p62 = scmp.eq.s32.totalorder %s24, 0
      %p63 = por %p61, %p62
      %s64 = ssub.s32 %s26, %s33
      %p65 = scmp.eq.s32.totalorder %s64, 0
      %s67 = sadd.s32 %s66, 1
      %s68 = scalar_select %p65, %s66, %s67
      %p71 = pneg %p65
      %p72 = scmp.eq.s32.totalorder %s18, 3
      %p73 = por %p71, %p72
      %p74 = scmp.ne.s32.totalorder %s66, %s69
      %p75 = scmp.eq.s32.totalorder %s18, 0
      %p76 = por %p74, %p75
      %p77 = scmp.ne.s32.totalorder %s66, %s69
      %p78 = scmp.eq.s32.totalorder %s23, 3
      %p79 = por %p77, %p78
      %p80 = scmp.ne.s32.totalorder %s69, %s70
      %p81 = scmp.eq.s32.totalorder %s23, 0
      %p82 = por %p80, %p81
      %p83 = scmp.ne.s32.totalorder %s69, %s70
      %p84 = scmp.eq.s32.totalorder %s24, 3
      %p85 = por %p83, %p84
      %p87 = scmp.ne.s32.totalorder %s70, %s86
      %p88 = scmp.eq.s32.totalorder %s24, 0
      %p89 = por %p87, %p88
      %s90 = ssub.s32 %s26, %s33
      %p91 = scmp.eq.s32.totalorder %s90, 0
      %s93 = sadd.s32 %s92, 1
      %s94 = scalar_select %p91, %s92, %s93
      %p97 = pneg %p91
      %p98 = scmp.eq.s32.totalorder %s18, 3
      %p99 = por %p97, %p98
      %p100 = scmp.ne.s32.totalorder %s92, %s95
      %p101 = scmp.eq.s32.totalorder %s18, 0
      %p102 = por %p100, %p101
      %p103 = scmp.ne.s32.totalorder %s92, %s95
      %p104 = scmp.eq.s32.totalorder %s23, 3
      %p105 = por %p103, %p104
      %p106 = scmp.ne.s32.totalorder %s95, %s96
      %p107 = scmp.eq.s32.totalorder %s23, 0
      %p108 = por %p106, %p107
      %p109 = scmp.ne.s32.totalorder %s95, %s96
      %p110 = scmp.eq.s32.totalorder %s24, 3
      %p111 = por %p109, %p110
      %p113 = scmp.ne.s32.totalorder %s96, %s112
      %p114 = scmp.eq.s32.totalorder %s24, 0
      %p115 = por %p113, %p114
      %s116 = ssub.s32 %s25, %s37
      %p117 = scmp.eq.s32.totalorder %s116, 0
      %s119 = sadd.s32 %s118, 1
      %s120 = scalar_select %p117, %s118, %s119
      %p123 = pneg %p117
      %p124 = scmp.eq.s32.totalorder %s18, 3
      %p125 = por %p123, %p124
      %p126 = scmp.ne.s32.totalorder %s118, %s121
      %p127 = scmp.eq.s32.totalorder %s18, 0
      %p128 = por %p126, %p127
      %p129 = scmp.ne.s32.totalorder %s118, %s121
      %p130 = scmp.eq.s32.totalorder %s23, 3
      %p131 = por %p129, %p130
      %p132 = scmp.ne.s32.totalorder %s121, %s122
      %p133 = scmp.eq.s32.totalorder %s23, 0
      %p134 = por %p132, %p133
      %p135 = scmp.ne.s32.totalorder %s121, %s122
      %p136 = scmp.eq.s32.totalorder %s24, 3
      %p137 = por %p135, %p136
      %p139 = scmp.ne.s32.totalorder %s122, %s138
      %p140 = scmp.eq.s32.totalorder %s24, 0
      %p141 = por %p139, %p140
      %p142 = scmp.le.s32.totalorder 1, %s18
      %p143 = scmp.lt.s32.totalorder %s18, 5
      %p144 = pnand %p142, %p143
      %p145 = pneg %p144
      // Predicated region
      $region9: #{tpu_custom_call.1} parent=5 // pred_check
        _
      $region10: #{tpu_custom_call.1} parent=5 // pred_check_branch
        %147 = sbr.rel (%p144) target = $region12
      $region11: #{tpu_custom_call.1} parent=5 // pred_region
        %s148 = ssub.s32 %s18, 1
      $region12: #{tpu_custom_call.1} parent=5 // pred_fallthru
        _
      %p149 = scmp.lt.s32.totalorder %s18, 4
      // Predicated region
      $region13: #{tpu_custom_call.1} parent=5 // pred_check
        %p150 = pneg %p149
      $region14: #{tpu_custom_call.1} parent=5 // pred_check_branch
        %152 = sbr.rel (%p150) target = $region16
      $region15: #{tpu_custom_call.1} parent=5 // pred_region
        // Predicated region
        $region17: #{tpu_custom_call.1} parent=15 // pred_check
          %p153 = pneg %p50
        $region18: #{tpu_custom_call.1} parent=15 // pred_check_branch
          %155 = sbr.rel (%p153) target = $region20
        $region19: #{tpu_custom_call.1} parent=15 // pred_region
          %s156 = sand.u32 %s40, 1
          %s157 = scalar_lea.sflag [#allocation4], %s156
          %s158 = sand.u32 %s40, 1
          %s159 = smul.addr %s158, 8
          %s160 = scalar_lea.vmem [#allocation3], %s159
          %s162 = ssub.s32 128, 128
          %163 = vsyncadd %s157, %s162
          %s164 = smul.addr %s25, 128
          %s165 = scalar_lea.hbm %s0, %s164
          %s167 = sshll.u32 %s160, 4
          %s168 = int_to_ptr.vmem [resolvable:$true] %s167
          %170 = dma.hbm_to_vmem [thread:$0]  %s165, 128, %s168, %s157
        $region20: #{tpu_custom_call.1} parent=15 // pred_fallthru
          _
        // Predicated region
        $region21: #{tpu_custom_call.1} parent=15 // pred_check
          %p171 = pneg %p76
        $region22: #{tpu_custom_call.1} parent=15 // pred_check_branch
          %173 = sbr.rel (%p171) target = $region24
        $region23: #{tpu_custom_call.1} parent=15 // pred_region
          %s174 = sand.u32 %s18, 1
          %s175 = scalar_lea.sflag [#allocation7], %s174
          %s176 = sand.u32 %s66, 1
          %s177 = smul.addr %s176, 256
          %s178 = scalar_lea.vmem [#allocation6], %s177
          %s180 = ssub.s32 4096, 4096
          %181 = vsyncadd %s175, %s180
          %s182 = smul.addr %s26, 32
          %s183 = smul.addr %s182, 128
          %s184 = scalar_lea.hbm %s1, %s183
          %s185 = sshll.u32 %s178, 4
          %s186 = int_to_ptr.vmem [resolvable:$true] %s185
          %191 = dma.hbm_to_vmem [thread:$0]  %s184, 4096, %s186, %s175, 256, 256, 16
        $region24: #{tpu_custom_call.1} parent=15 // pred_fallthru
          _
        // Predicated region
        $region25: #{tpu_custom_call.1} parent=15 // pred_check
          %p192 = pneg %p102
        $region26: #{tpu_custom_call.1} parent=15 // pred_check_branch
          %194 = sbr.rel (%p192) target = $region28
        $region27: #{tpu_custom_call.1} parent=15 // pred_region
          %s195 = sand.u32 %s18, 1
          %s196 = scalar_lea.sflag [#allocation7], %s195
          %s197 = sand.u32 %s92, 1
          %s198 = smul.addr %s197, 128
          %s199 = scalar_lea.vmem [#allocation8], %s198
          %s200 = smul.u32 16, %s26
          %s202 = ssub.s32 2048, 2048
          %203 = vsyncadd %s196, %s202
          %s204 = smul.addr %s200, 128
          %s205 = scalar_lea.hbm %s2, %s204
          %s206 = sshll.u32 %s199, 4
          %s207 = int_to_ptr.vmem [resolvable:$true] %s206
          %212 = dma.hbm_to_vmem [thread:$0]  %s205, 2048, %s207, %s196, 128, 128, 8
        $region28: #{tpu_custom_call.1} parent=15 // pred_fallthru
          _
      $region16: #{tpu_custom_call.1} parent=5 // pred_fallthru
        _
      %p213 = scmp.le.s32.totalorder 1, %s18
      %p214 = scmp.lt.s32.totalorder %s18, 5
      %p215 = pnand %p213, %p214
      %p216 = pneg %p215
      // Predicated region
      $region29: #{tpu_custom_call.1} parent=5 // pred_check
        _
      $region30: #{tpu_custom_call.1} parent=5 // pred_check_branch
        %218 = sbr.rel (%p215) target = $region32
      $region31: #{tpu_custom_call.1} parent=5 // pred_region
        %s219 = ssub.s32 %s18, 1
        %s220 = sand.u32 %s43, 1
        %s221 = scalar_lea.sflag [#allocation4], %s220
        %s222 = sand.u32 %s43, 1
        %s223 = smul.addr %s222, 8
        %s224 = scalar_lea.vmem [#allocation3], %s223
        // Predicated region
        $region33: #{tpu_custom_call.1} parent=31 // pred_check
          %p225 = pneg %p56
        $region34: #{tpu_custom_call.1} parent=31 // pred_check_branch
          %227 = sbr.rel (%p225) target = $region36
        $region35: #{tpu_custom_call.1} parent=31 // pred_region
          %228 = dma.done %s221, 128
        $region36: #{tpu_custom_call.1} parent=31 // pred_fallthru
          _
        %s229 = sand.u32 %s23, 1
        %s230 = scalar_lea.sflag [#allocation7], %s229
        %s231 = sand.u32 %s69, 1
        %s232 = smul.addr %s231, 256
        %s233 = scalar_lea.vmem [#allocation6], %s232
        // Predicated region
        $region37: #{tpu_custom_call.1} parent=31 // pred_check
          %p234 = pneg %p82
        $region38: #{tpu_custom_call.1} parent=31 // pred_check_branch
          %236 = sbr.rel (%p234) target = $region40
        $region39: #{tpu_custom_call.1} parent=31 // pred_region
          %237 = dma.done %s230, 4096
        $region40: #{tpu_custom_call.1} parent=31 // pred_fallthru
          _
        %s238 = sand.u32 %s23, 1
        %s239 = scalar_lea.sflag [#allocation7], %s238
        %s240 = sand.u32 %s95, 1
        %s241 = smul.addr %s240, 128
        %s242 = scalar_lea.vmem [#allocation8], %s241
        // Predicated region
        $region41: #{tpu_custom_call.1} parent=31 // pred_check
          %p243 = pneg %p108
        $region42: #{tpu_custom_call.1} parent=31 // pred_check_branch
          %245 = sbr.rel (%p243) target = $region44
        $region43: #{tpu_custom_call.1} parent=31 // pred_region
          %246 = dma.done %s239, 2048
        $region44: #{tpu_custom_call.1} parent=31 // pred_fallthru
          _
        %s247 = sand.u32 %s43, 1
        %s248 = scalar_lea.sflag [#allocation4], %s247
        %s249 = sand.u32 %s43, 1
        %s250 = smul.addr %s249, 8
        %s251 = scalar_lea.vmem [#allocation3], %s250
        %p252 = pneg %p56
        %p253 = pneg %p53
        %s254 = sand.u32 %s23, 1
        %s255 = scalar_lea.sflag [#allocation7], %s254
        %s256 = sand.u32 %s69, 1
        %s257 = smul.addr %s256, 256
        %s258 = scalar_lea.vmem [#allocation6], %s257
        %p259 = pneg %p82
        %p260 = pneg %p79
        %s261 = sand.u32 %s23, 1
        %s262 = scalar_lea.sflag [#allocation7], %s261
        %s263 = sand.u32 %s95, 1
        %s264 = smul.addr %s263, 128
        %s265 = scalar_lea.vmem [#allocation8], %s264
        %p266 = pneg %p108
        %p267 = pneg %p105
        %p268 = pneg %p134
        %p269 = pneg %p131
        %s270 = sand.u32 %s121, 1
        %s271 = scalar_lea.sflag [#allocation5], %s270
        %s272 = sand.u32 %s121, 1
        %s273 = smul.addr %s272, 8
        %s274 = scalar_lea.vmem [#allocation9], %s273
        %s275 = smul.u32 16, %s28
        %p276 = scmp.eq.s32.totalorder %s28, 0
        // Predicated region
        $region45: #{tpu_custom_call.1} parent=31 // pred_check
          %p277 = pneg %p276
        $region46: #{tpu_custom_call.1} parent=31 // pred_check_branch
          %279 = sbr.rel (%p277) target = $region48
        $region47: #{tpu_custom_call.1} parent=31 // pred_region
          %280 = vst [vmem:[#allocation2] sm:$0xff] 0.0
        $region48: #{tpu_custom_call.1} parent=31 // pred_fallthru
          _
        %v281 = vld [vmem:[%s224] sm:$0xff]
        %v282 = vld [vmem:[%s233] sm:$0xff]
        %v283 = vld [vmem:[%s233 + $0x8] sm:$0xff]
        %v284 = vld [vmem:[%s233 + $0x10] sm:$0xff]
        %v285 = vld [vmem:[%s233 + $0x18] sm:$0xff]
        %v286 = vld [vmem:[%s233 + $0x20] sm:$0xff]
        %v287 = vld [vmem:[%s233 + $0x28] sm:$0xff]
        %v288 = vld [vmem:[%s233 + $0x30] sm:$0xff]
        %v289 = vld [vmem:[%s233 + $0x38] sm:$0xff]
        %v290 = vld [vmem:[%s233 + $0x40] sm:$0xff]
        %v291 = vld [vmem:[%s233 + $0x48] sm:$0xff]
        %v292 = vld [vmem:[%s233 + $0x50] sm:$0xff]
        %v293 = vld [vmem:[%s233 + $0x58] sm:$0xff]
        %v294 = vld [vmem:[%s233 + $0x60] sm:$0xff]
        %v295 = vld [vmem:[%s233 + $0x68] sm:$0xff]
        %v296 = vld [vmem:[%s233 + $0x70] sm:$0xff]
        %v297 = vld [vmem:[%s233 + $0x78] sm:$0xff]
        %v298 = vld [vmem:[%s233 + $0x80] sm:$0xff]
        %v299 = vld [vmem:[%s233 + $0x88] sm:$0xff]
        %v300 = vld [vmem:[%s233 + $0x90] sm:$0xff]
        %v301 = vld [vmem:[%s233 + $0x98] sm:$0xff]
        %v302 = vld [vmem:[%s233 + $0xa0] sm:$0xff]
        %v303 = vld [vmem:[%s233 + $0xa8] sm:$0xff]
        %v304 = vld [vmem:[%s233 + $0xb0] sm:$0xff]
        %v305 = vld [vmem:[%s233 + $0xb8] sm:$0xff]
        %v306 = vld [vmem:[%s233 + $0xc0] sm:$0xff]
        %v307 = vld [vmem:[%s233 + $0xc8] sm:$0xff]
        %v308 = vld [vmem:[%s233 + $0xd0] sm:$0xff]
        %v309 = vld [vmem:[%s233 + $0xd8] sm:$0xff]
        %v310 = vld [vmem:[%s233 + $0xe0] sm:$0xff]
        %v311 = vld [vmem:[%s233 + $0xe8] sm:$0xff]
        %v312 = vld [vmem:[%s233 + $0xf0] sm:$0xff]
        %v313 = vld [vmem:[%s233 + $0xf8] sm:$0xff]
        %314 = vmatprep.subr.mxu0 %v283
        %315 = vmatpush1.msra.mxu0 %v282
        %316 = vmatprep.subr.mxu0 %v285
        %317 = vmatpush1.msra.mxu0 %v284
        %318 = vmatprep.subr.mxu0 %v287
        %319 = vmatpush1.msra.mxu0 %v286
        %320 = vmatprep.subr.mxu0 %v289
        %321 = vmatpush1.msra.mxu0 %v288
        %322 = vmatprep.subr.mxu0 %v291
        %323 = vmatpush1.msra.mxu0 %v290
        %324 = vmatprep.subr.mxu0 %v293
        %325 = vmatpush1.msra.mxu0 %v292
        %326 = vmatprep.subr.mxu0 %v295
        %327 = vmatpush1.msra.mxu0 %v294
        %328 = vmatprep.subr.mxu0 %v297
        %329 = vmatpush1.msra.mxu0 %v296
        %330 = vmatprep.subr.mxu0 %v299
        %331 = vmatpush1.msra.mxu0 %v298
        %332 = vmatprep.subr.mxu0 %v301
        %333 = vmatpush1.msra.mxu0 %v300
        %334 = vmatprep.subr.mxu0 %v303
        %335 = vmatpush1.msra.mxu0 %v302
        %336 = vmatprep.subr.mxu0 %v305
        %337 = vmatpush1.msra.mxu0 %v304
        %338 = vmatprep.subr.mxu0 %v307
        %339 = vmatpush1.msra.mxu0 %v306
        %340 = vmatprep.subr.mxu0 %v309
        %341 = vmatpush1.msra.mxu0 %v308
        %342 = vmatprep.subr.mxu0 %v311
        %343 = vmatpush1.msra.mxu0 %v310
        %344 = vmatprep.subr.mxu0 %v313
        %345 = vmatpush1.msra.mxu0 %v312
        %346 = vmatprep.subr.mxu0 0.0
        %347 = vmatpush1.msra.mxu0 0.0
        %348 = vmatprep.subr.mxu0 0.0
        %349 = vmatpush1.msra.mxu0 0.0
        %350 = vmatprep.subr.mxu0 0.0
        %351 = vmatpush1.msra.mxu0 0.0
        %352 = vmatprep.subr.mxu0 0.0
        %353 = vmatpush1.msra.mxu0 0.0
        %354 = vmatprep.subr.mxu0 0.0
        %355 = vmatpush1.msra.mxu0 0.0
        %356 = vmatprep.subr.mxu0 0.0
        %357 = vmatpush1.msra.mxu0 0.0
        %358 = vmatprep.subr.mxu0 0.0
        %359 = vmatpush1.msra.mxu0 0.0
        %360 = vmatprep.subr.mxu0 0.0
        %361 = vmatpush1.msra.mxu0 0.0
        %362 = vmatprep.subr.mxu0 0.0
        %363 = vmatpush1.msra.mxu0 0.0
        %364 = vmatprep.subr.mxu0 0.0
        %365 = vmatpush1.msra.mxu0 0.0
        %366 = vmatprep.subr.mxu0 0.0
        %367 = vmatpush1.msra.mxu0 0.0
        %368 = vmatprep.subr.mxu0 0.0
        %369 = vmatpush1.msra.mxu0 0.0
        %370 = vmatprep.subr.mxu0 0.0
        %371 = vmatpush1.msra.mxu0 0.0
        %372 = vmatprep.subr.mxu0 0.0
        %373 = vmatpush1.msra.mxu0 0.0
        %374 = vmatprep.subr.mxu0 0.0
        %375 = vmatpush1.msra.mxu0 0.0
        %376 = vmatprep.subr.mxu0 0.0
        %377 = vmatpush1.msra.mxu0 0.0
        %378 = vmatprep.mubr.f32.mxu0 0.0
        %379 = vmatmul.mubr.f32.gmra.mrb[0].mxu0 %v281
        %v380 = vpop.f32.mrb[0].mxu0
        %v381 = vadd.f32 0.0, %v380
        %v382 = vpop.f32.mrb[0].mxu0
        %v383 = vadd.f32 0.0, %v382
        %384 = vdwg.mxu0
        %v385 = vxor.u32 %v381, 2147483648
        %v386 = vmul.f32 %v385, 1.442695
        %v387 = vpow.pop %v386
        %v388 = vadd.f32 %v387, 1.0
        %v389 = vrcp.pop %v388
        %v390 = vmul.f32 1.0, %v389
        %v391 = vmul.f32 %v381, %v390
        %v392 = vmul.f32 %v391, %v383
        %v393 = vld [vmem:[#allocation2] sm:$0xff]
        %v394 = vld [vmem:[%s242] sm:$0xff]
        %v395 = vld [vmem:[%s242 + $0x8] sm:$0xff]
        %v396 = vld [vmem:[%s242 + $0x10] sm:$0xff]
        %v397 = vld [vmem:[%s242 + $0x18] sm:$0xff]
        %v398 = vld [vmem:[%s242 + $0x20] sm:$0xff]
        %v399 = vld [vmem:[%s242 + $0x28] sm:$0xff]
        %v400 = vld [vmem:[%s242 + $0x30] sm:$0xff]
        %v401 = vld [vmem:[%s242 + $0x38] sm:$0xff]
        %v402 = vld [vmem:[%s242 + $0x40] sm:$0xff]
        %v403 = vld [vmem:[%s242 + $0x48] sm:$0xff]
        %v404 = vld [vmem:[%s242 + $0x50] sm:$0xff]
        %v405 = vld [vmem:[%s242 + $0x58] sm:$0xff]
        %v406 = vld [vmem:[%s242 + $0x60] sm:$0xff]
        %v407 = vld [vmem:[%s242 + $0x68] sm:$0xff]
        %v408 = vld [vmem:[%s242 + $0x70] sm:$0xff]
        %v409 = vld [vmem:[%s242 + $0x78] sm:$0xff]
        %410 = vmatprep.subr.mxu0 0.0
        %411 = vmatpush1.msra.mxu0 %v394
        %412 = vmatprep.subr.mxu0 0.0
        %413 = vmatpush1.msra.mxu0 %v395
        %414 = vmatprep.subr.mxu0 0.0
        %415 = vmatpush1.msra.mxu0 %v396
        %416 = vmatprep.subr.mxu0 0.0
        %417 = vmatpush1.msra.mxu0 %v397
        %418 = vmatprep.subr.mxu0 0.0
        %419 = vmatpush1.msra.mxu0 %v398
        %420 = vmatprep.subr.mxu0 0.0
        %421 = vmatpush1.msra.mxu0 %v399
        %422 = vmatprep.subr.mxu0 0.0
        %423 = vmatpush1.msra.mxu0 %v400
        %424 = vmatprep.subr.mxu0 0.0
        %425 = vmatpush1.msra.mxu0 %v401
        %426 = vmatprep.subr.mxu0 0.0
        %427 = vmatpush1.msra.mxu0 %v402
        %428 = vmatprep.subr.mxu0 0.0
        %429 = vmatpush1.msra.mxu0 %v403
        %430 = vmatprep.subr.mxu0 0.0
        %431 = vmatpush1.msra.mxu0 %v404
        %432 = vmatprep.subr.mxu0 0.0
        %433 = vmatpush1.msra.mxu0 %v405
        %434 = vmatprep.subr.mxu0 0.0
        %435 = vmatpush1.msra.mxu0 %v406
        %436 = vmatprep.subr.mxu0 0.0
        %437 = vmatpush1.msra.mxu0 %v407
        %438 = vmatprep.subr.mxu0 0.0
        %439 = vmatpush1.msra.mxu0 %v408
        %440 = vmatprep.subr.mxu0 0.0
        %441 = vmatpush1.msra.mxu0 %v409
        %442 = vmatprep.subr.mxu0 0.0
        %443 = vmatpush1.msra.mxu0 0.0
        %444 = vmatprep.subr.mxu0 0.0
        %445 = vmatpush1.msra.mxu0 0.0
        %446 = vmatprep.subr.mxu0 0.0
        %447 = vmatpush1.msra.mxu0 0.0
        %448 = vmatprep.subr.mxu0 0.0
        %449 = vmatpush1.msra.mxu0 0.0
        %450 = vmatprep.subr.mxu0 0.0
        %451 = vmatpush1.msra.mxu0 0.0
        %452 = vmatprep.subr.mxu0 0.0
        %453 = vmatpush1.msra.mxu0 0.0
        %454 = vmatprep.subr.mxu0 0.0
        %455 = vmatpush1.msra.mxu0 0.0
        %456 = vmatprep.subr.mxu0 0.0
        %457 = vmatpush1.msra.mxu0 0.0
        %458 = vmatprep.subr.mxu0 0.0
        %459 = vmatpush1.msra.mxu0 0.0
        %460 = vmatprep.subr.mxu0 0.0
        %461 = vmatpush1.msra.mxu0 0.0
        %462 = vmatprep.subr.mxu0 0.0
        %463 = vmatpush1.msra.mxu0 0.0
        %464 = vmatprep.subr.mxu0 0.0
        %465 = vmatpush1.msra.mxu0 0.0
        %466 = vmatprep.subr.mxu0 0.0
        %467 = vmatpush1.msra.mxu0 0.0
        %468 = vmatprep.subr.mxu0 0.0
        %469 = vmatpush1.msra.mxu0 0.0
        %470 = vmatprep.subr.mxu0 0.0
        %471 = vmatpush1.msra.mxu0 0.0
        %472 = vmatprep.subr.mxu0 0.0
        %473 = vmatpush1.msra.mxu0 0.0
        %474 = vmatprep.mubr.f32.mxu0 0.0
        %475 = vmatmul.mubr.f32.gmra.mrb[0].mxu0 %v392
        %v476 = vpop.f32.mrb[0].mxu0
        %v477 = vadd.f32 0.0, %v476
        %v478 = vpop.f32.mrb[0].mxu0
        %479 = vdwg.mxu0
        %v480 = vadd.f32 %v393, %v477
        %481 = vst [vmem:[#allocation2] sm:$0xff] %v480
        %p482 = scmp.eq.s32.totalorder %s28, 1
        // Predicated region
        $region49: #{tpu_custom_call.1} parent=31 // pred_check
          %p483 = pneg %p482
        $region50: #{tpu_custom_call.1} parent=31 // pred_check_branch
          %485 = sbr.rel (%p483) target = $region52
        $region51: #{tpu_custom_call.1} parent=31 // pred_region
          %v486 = vld [vmem:[#allocation2] sm:$0xff]
          %487 = vst [vmem:[%s274] sm:$0xff] %v486
        $region52: #{tpu_custom_call.1} parent=31 // pred_fallthru
          _
        %s488 = sand.u32 %s121, 1
        %s489 = scalar_lea.sflag [#allocation5], %s488
        %s490 = sand.u32 %s121, 1
        %s491 = smul.addr %s490, 8
        %s492 = scalar_lea.vmem [#allocation9], %s491
        // Predicated region
        $region53: #{tpu_custom_call.1} parent=31 // pred_check
          %p493 = pneg %p131
        $region54: #{tpu_custom_call.1} parent=31 // pred_check_branch
          %495 = sbr.rel (%p493) target = $region56
        $region55: #{tpu_custom_call.1} parent=31 // pred_region
          %s497 = ssub.s32 128, 128
          %498 = vsyncadd %s489, %s497
          %s499 = smul.addr %s27, 128
          %s500 = scalar_lea.hbm %s3, %s499
          %s502 = sshll.u32 %s492, 4
          %s503 = int_to_ptr.vmem [resolvable:$true] %s502
          %505 = dma.vmem_to_hbm [thread:$0]  %s503, 128, %s500, %s489
        $region56: #{tpu_custom_call.1} parent=31 // pred_fallthru
          _
      $region32: #{tpu_custom_call.1} parent=5 // pred_fallthru
        _
      %p506 = scmp.le.s32.totalorder 2, %s18
      // Predicated region
      $region57: #{tpu_custom_call.1} parent=5 // pred_check
        %p507 = pneg %p506
      $region58: #{tpu_custom_call.1} parent=5 // pred_check_branch
        %509 = sbr.rel (%p507) target = $region60
      $region59: #{tpu_custom_call.1} parent=5 // pred_region
        %s510 = ssub.s32 %s18, 2
        // Predicated region
        $region61: #{tpu_custom_call.1} parent=59 // pred_check
          %p511 = pneg %p137
        $region62: #{tpu_custom_call.1} parent=59 // pred_check_branch
          %513 = sbr.rel (%p511) target = $region64
        $region63: #{tpu_custom_call.1} parent=59 // pred_region
          %s514 = sand.u32 %s122, 1
          %s515 = scalar_lea.sflag [#allocation5], %s514
          %s516 = sand.u32 %s122, 1
          %s517 = smul.addr %s516, 8
          %s518 = scalar_lea.vmem [#allocation9], %s517
          %519 = dma.done %s515, 128
        $region64: #{tpu_custom_call.1} parent=59 // pred_fallthru
          _
      $region60: #{tpu_custom_call.1} parent=5 // pred_fallthru
        _
    $region6: #{tpu_custom_call.1} parent=1 // loop_footer
      %s22 = sadd.s32 1, %s18
    $region7: #{tpu_custom_call.1} parent=1 // loop_footer_branch
      %17 = sbr.rel target = $region3
    $region8: #{tpu_custom_call.1} parent=1 // loop_exit
      _
    %520 = vsyncpa [#allocation4], 1
    %s521 = scalar_lea.sflag [#allocation4], 1
    %522 = vsyncpa %s521, 1
    %523 = vsyncpa [#allocation7], 1
    %s524 = scalar_lea.sflag [#allocation7], 1
    %525 = vsyncpa %s524, 1
    %526 = vsyncpa [#allocation5], 1
    %s527 = scalar_lea.sflag [#allocation5], 1
    %528 = vsyncpa %s527, 1

</llo_original>
